<compile_context>
chip_gen: v5e
topology: v5e:2x2
jax: 0.10.0
libtpu: 0.0.40
codegen_flags: <defaults>
</compile_context>

<pallas_src>
import numpy as np

import jax
import jax.numpy as jnp
from jax.experimental import pallas as pl
from jax.experimental.pallas import tpu as pltpu


# ----------------------------- Pallas kernel --------------------------------

def _ipnn_kernel(xvb_ref, wstk_ref, w1p_ref, b1_ref, w2_ref, b2_ref,
                 w3_ref, b3_ref, out_ref):
    """Fused IPNN forward on one batch tile; batch lives on the lane axis.

    xvb_ref : (Bt, FD)          raw embedding tile (natural layout from gather)
    wstk_ref: (2*PD8+H1, FD)    stacked [left-select; right-select; w1a] weight
                                (prob and BN scale folded in)
    w1p_ref : (H1, PD8)         BN-folded, row-expanded pairwise weight
    b1/b2   : (H1,1)/(H2,1)     BN-folded biases (f32)
    w2_ref  : (H2, H1)
    w3_ref  : (H2, 1), b3: (1,1)
    out_ref : (1, Bt)           lane-dense score row (f32)
    """
    xb = xvb_ref[...]                                       # (Bt, FD)

    # Single stacked matmul replacing three separate MXU pushes.  Contracting
    # both operands on their last dim puts the batch on lanes of the result
    # without any wrapper-side transpose of the activation stream.
    stacked = jnp.einsum("mk,bk->mb", wstk_ref[...], xb,
                         preferred_element_type=jnp.float32)  # (Mstk, Bt) f32

    pd8 = w1p_ref.shape[1]                                   # sublane-aligned
    left = stacked[:pd8, :]                                  # xe[:, i_p, d]
    right = stacked[pd8:2 * pd8, :]                          # xe[:, j_p, d]
    h = stacked[2 * pd8:, :]                                 # w1a path (H1, Bt)

    # Pairwise field products (VPU, f32), padded rows are zero by construction.
    pair = left * right                                      # (PD8, Bt)

    # First layer: embedding term + pairwise term into one accumulator
    # (replaces the concat); BN already folded into weights/bias.
    h = h + jnp.dot(w1p_ref[...], pair.astype(w1p_ref.dtype),
                    preferred_element_type=jnp.float32)
    h = jnp.maximum(h + b1_ref[...], 0.0)                    # (H1, Bt) f32

    # Second layer.
    h = jnp.dot(w2_ref[...], h.astype(w2_ref.dtype),
                preferred_element_type=jnp.float32)
    h = jnp.maximum(h + b2_ref[...], 0.0)                    # (H2, Bt) f32

    # Final (H2 -> 1) projection: VPU multiply + sublane reduce, lane-dense row.
    score = jnp.sum(h * w3_ref[...], axis=0, keepdims=True) + b3_ref[...]
    out_ref[...] = score.astype(out_ref.dtype)               # (1, Bt)


# ------------------------------ JAX wrapper ---------------------------------

def _round_up(x, m):
    return (x + m - 1) // m * m


def _pick_batch_tile(B, target):
    """Lane-dense batch tile: multiple of 128, small padding waste, and
    >= 2 grid steps when there is enough work (v7x two-TC megacore)."""
    target = max(128, _round_up(target, 128))
    b128 = _round_up(max(B, 1), 128)
    bt = min(target, b128)
    n = -(-b128 // bt)                       # tiles at the target size
    if n == 1 and b128 > 128:
        n = 2                                # keep both TensorCores busy (v7x)
    bt = _round_up(-(-b128 // n), 128)       # even-ish tiles, minimal padding
    return bt


def ipnn_search_forward(x, params, beta=1.0, b_tile=8192,
                        compute_dtype=jnp.float32):
    """x: (B, F) int32 global feature ids.  Returns (B,) f32 scores.

    compute_dtype=jnp.bfloat16 halves the HBM activation stream and runs the
    MXU at native bf16 rate (recommended on v6e/v7x); elementwise math stays f32.
    """
    emb = params["embedding"]                          # (feature_num, D)
    arch = params["arch"]                              # (F,)
    B, F = x.shape
    D = emb.shape[1]
    FD = F * D
    pairs = [(i, j) for i in range(F) for j in range(i + 1, F)]
    P = len(pairs)
    PD = P * D
    PD8 = _round_up(PD, 8)                             # sublane-aligned section

    prob = jax.nn.softmax(arch.astype(jnp.float32) / float(beta))  # (F,)

    # Fold BatchNorm1d (inference stats) into scale/shift.
    eps = 1e-5
    s1 = params["bn1_gamma"] / jnp.sqrt(params["bn1_var"] + eps)
    t1 = params["bn1_beta"] - params["bn1_mean"] * s1
    s2 = params["bn2_gamma"] / jnp.sqrt(params["bn2_var"] + eps)
    t2 = params["bn2_beta"] - params["bn2_mean"] * s2

    w1 = params["w1"].astype(jnp.float32)              # (FD + P, H1)
    w1a = w1[:FD]                                      # acts on flattened xe
    w1b = w1[FD:]                                      # acts on pairwise products

    # Fold prob into the embedding-path weight (xe = xv * prob) and BN scale.
    prob_field = jnp.repeat(prob, D)                   # (FD,)
    w1a_t = ((prob_field[:, None] * w1a) * s1[None, :]).T          # (H1, FD)
    # Row-expand the pairwise weight so product@w1b == pair@(w1b repeated D).
    w1p_t = jnp.pad(jnp.repeat(w1b * s1[None, :], D, axis=0).T,
                    ((0, 0), (0, PD8 - PD)))                        # (H1, PD8)
    b1_c = (params["b1"] * s1 + t1)[:, None]                        # (H1, 1)
    w2_t = (params["w2"] * s2[None, :]).T                           # (H2, H1)
    b2_c = (params["b2"] * s2 + t2)[:, None]                        # (H2, 1)
    w3_c = params["w3"].astype(jnp.float32)                         # (H2, 1)
    b3_c = params["b3"].astype(jnp.float32)[:, None]                # (1, 1)

    # Static 0/1 pair-selection matrices with prob folded in (padded to PD8):
    #   slt[p*D+d, i_p*D+d] = prob[i_p],  srt[p*D+d, j_p*D+d] = prob[j_p]
    rows = np.repeat(np.array([i for i, _ in pairs], np.int32), D)  # (PD,)
    cols = np.repeat(np.array([j for _, j in pairs], np.int32), D)
    d_idx = np.tile(np.arange(D, dtype=np.int32), P)
    sel_l = np.zeros((PD8, FD), np.float32)
    sel_r = np.zeros((PD8, FD), np.float32)
    q = np.arange(PD)
    sel_l[q, rows * D + d_idx] = 1.0
    sel_r[q, cols * D + d_idx] = 1.0
    prob_l = jnp.pad(prob[jnp.asarray(rows)], (0, PD8 - PD))
    prob_r = jnp.pad(prob[jnp.asarray(cols)], (0, PD8 - PD))
    slt = jnp.asarray(sel_l) * prob_l[:, None]                      # (PD8, FD)
    srt = jnp.asarray(sel_r) * prob_r[:, None]                      # (PD8, FD)

    # Stack the three xt-consuming weights -> a single MXU push per tile.
    # M = 2*PD8 + H1 (= 128 for F=4, D=8, H1=32), sections at offsets 0 / PD8
    # / 2*PD8, all multiples of 8, so the in-kernel slices are aligned views.
    w_stk = jnp.concatenate([slt, srt, w1a_t], axis=0)              # (Mstk, FD)

    # MXU operands in compute_dtype (bf16 on v6e/v7x); bias / w3 stay f32.
    w_stk = w_stk.astype(compute_dtype)
    w1p_t = w1p_t.astype(compute_dtype)
    w2_t = w2_t.astype(compute_dtype)

    # ---------------- batch tiling ----------------
    bt = _pick_batch_tile(B, b_tile)
    B_pad = _round_up(B, bt)

    # Pad the cheap index array (not the activation stream); index 0 is valid.
    x_pad = jnp.pad(x.astype(jnp.int32), ((0, B_pad - B), (0, 0)))
    # TODO(synk): the embedding gather stays as XLA glue; fuse it into the
    # kernel with PrefetchScalarGridSpec only if it dominates the trace.
    xvb = jnp.take(emb.astype(compute_dtype), x_pad, axis=0).reshape(B_pad, FD)

    grid = (B_pad // bt,)

    def full(a):
        # Full-array block, constant index_map -> resident across the grid.
        return pl.BlockSpec(a.shape, lambda i: (0, 0))

    out = pl.pallas_call(
        _ipnn_kernel,
        out_shape=jax.ShapeDtypeStruct((1, B_pad), jnp.float32),
        grid=grid,
        in_specs=[
            pl.BlockSpec((bt, FD), lambda i: (i, 0)),   # contiguous HBM tile
            full(w_stk), full(w1p_t), full(b1_c),
            full(w2_t), full(b2_c), full(w3_c), full(b3_c),
        ],
        out_specs=pl.BlockSpec((1, bt), lambda i: (0, i)),
        compiler_params=pltpu.CompilerParams(
            dimension_semantics=("parallel",),          # both TCs on v7x
            vmem_limit_bytes=48 * 1024 * 1024),         # v5e default is 16 MiB
    )(xvb, w_stk, w1p_t, b1_c, w2_t, b2_c, w3_c, b3_c)

    return out[0, :B]                                   # (B,) f32


# ---------------------------- pure-JAX reference ------------------------------

def ipnn_reference(x, params, beta=1.0):
    emb = params["embedding"]
    arch = params["arch"]
    B, F = x.shape
    D = emb.shape[1]
    xv = jnp.take(emb, x, axis=0)
    prob = jax.nn.softmax(arch / float(beta))
    xe = xv * prob[None, :, None]
    rows = jnp.asarray([i for i in range(F) for j in range(i + 1, F)], jnp.int32)
    cols = jnp.asarray([j for i in range(F) for j in range(i + 1, F)], jnp.int32)
    product = jnp.sum(xe[:, rows, :] * xe[:, cols, :], axis=2)
    xcat = jnp.concatenate([xe.reshape(B, F * D), product], axis=1)
    eps = 1e-5
    hp = jax.lax.Precision.HIGHEST
    h = jnp.dot(xcat, params["w1"], precision=hp) + params["b1"]
    h = (h - params["bn1_mean"]) / jnp.sqrt(params["bn1_var"] + eps) \
        * params["bn1_gamma"] + params["bn1_beta"]
    h = jnp.maximum(h, 0.0)
    h = jnp.dot(h, params["w2"], precision=hp) + params["b2"]
    h = (h - params["bn2_mean"]) / jnp.sqrt(params["bn2_var"] + eps) \
        * params["bn2_gamma"] + params["bn2_beta"]
    h = jnp.maximum(h, 0.0)
    score = jnp.dot(h, params["w3"], precision=hp) + params["b3"]
    return score[:, 0]


# ------------------------------ Param setup ---------------------------------

def init_params(key, field_dim, latent_dim, mlp_dims):
    field_num = len(field_dim)
    feature_num = sum(field_dim)
    embed_output_dim = field_num * latent_dim
    product_output_dim = field_num * (field_num - 1) // 2
    dnn_input_dim = embed_output_dim + product_output_dim

    keys = jax.random.split(key, 12)

    def xavier(k, shape):
        fan_in, fan_out = shape[0], shape[1]
        limit = (6.0 / (fan_in + fan_out)) ** 0.5
        return jax.random.uniform(k, shape, jnp.float32, -limit, limit)

    h1, h2 = mlp_dims
    params = {
        "embedding": xavier(keys[0], (feature_num, latent_dim)),
        "arch": jax.random.normal(keys[1], (field_num,), jnp.float32) * 0.5,
        "w1": xavier(keys[2], (dnn_input_dim, h1)),
        "b1": jax.random.normal(keys[3], (h1,), jnp.float32) * 0.01,
        "w2": xavier(keys[4], (h1, h2)),
        "b2": jax.random.normal(keys[5], (h2,), jnp.float32) * 0.01,
        "w3": xavier(keys[6], (h2, 1)),
        "b3": jax.random.normal(keys[7], (1,), jnp.float32) * 0.01,
        # BatchNorm1d inference params/stats (deterministic).
        "bn1_gamma": jnp.ones((h1,), jnp.float32),
        "bn1_beta": jnp.zeros((h1,), jnp.float32),
        "bn1_mean": jnp.zeros((h1,), jnp.float32),
        "bn1_var": jnp.ones((h1,), jnp.float32),
        "bn2_gamma": jnp.ones((h2,), jnp.float32),
        "bn2_beta": jnp.zeros((h2,), jnp.float32),
        "bn2_mean": jnp.zeros((h2,), jnp.float32),
        "bn2_var": jnp.ones((h2,), jnp.float32),
    }
    return params


# --------------------------------- main --------------------------------------

if __name__ == "__main__":
    # Small, module-consistent shapes.
    field_dim = [10, 12, 14, 8]        # 4 fields, feature_num = 44
    latent_dim = 8
    mlp_dims = [32, 16]
    batch = 8
    beta = 1.0

    key = jax.random.PRNGKey(0)
    pkey, xkey = jax.random.split(key)
    params = init_params(pkey, field_dim, latent_dim, mlp_dims)

    # Build global feature ids: one id per field, offset into the shared table.
    offsets = [0]
    for d in field_dim[:-1]:
        offsets.append(offsets[-1] + d)
    cols = []
    xkeys = jax.random.split(xkey, len(field_dim))
    for f, (off, d) in enumerate(zip(offsets, field_dim)):
        cols.append(jax.random.randint(xkeys[f], (batch, 1), off, off + d))
    x = jnp.concatenate(cols, axis=1).astype(jnp.int32)    # (B, F)

    # f32 path (default): tight check against the HIGHEST-precision reference.
    score = ipnn_search_forward(x, params, beta=beta)
    jax.block_until_ready(score)
    assert score.shape == (batch,), score.shape
    assert score.dtype == jnp.float32

    ref = ipnn_reference(x, params, beta=beta)
    jax.block_until_ready(ref)
    assert jnp.allclose(score, ref, rtol=1e-3, atol=1e-4), (score, ref)

    # bf16 fast path (recommended on v6e/v7x): bf16 HBM stream + MXU operands,
    # f32 elementwise/accumulation; looser tolerance.
    score_bf16 = ipnn_search_forward(x, params, beta=beta,
                                     compute_dtype=jnp.bfloat16)
    jax.block_until_ready(score_bf16)
    assert jnp.allclose(score_bf16, ref, rtol=5e-2, atol=5e-2), (score_bf16, ref)

    print("KERNEL_OK")
</pallas_src>

<mosaic_0001>
module attributes {stable_mosaic.version = 11 : i64} {
  func.func @_ipnn_kernel(%arg0: i32, %arg1: memref<128x32xf32, #tpu.memory_space<vmem>>, %arg2: memref<128x32xf32, #tpu.memory_space<vmem>>, %arg3: memref<32x48xf32, #tpu.memory_space<vmem>>, %arg4: memref<32x1xf32, #tpu.memory_space<vmem>>, %arg5: memref<16x32xf32, #tpu.memory_space<vmem>>, %arg6: memref<16x1xf32, #tpu.memory_space<vmem>>, %arg7: memref<16x1xf32, #tpu.memory_space<vmem>>, %arg8: memref<1x1xf32, #tpu.memory_space<vmem>>, %arg9: memref<1x128xf32, #tpu.memory_space<vmem>>) attributes {dimension_semantics = [#tpu.dimension_semantics<parallel>], iteration_bounds = array<i64: 1>, scalar_prefetch = 0 : i64, scratch_operands = 0 : i64, tpu.core_type = #tpu.core_type<tc>, window_params = [{transform_indices = @transform_0, window_bounds = array<i64: 128, 32>}, {pipeline_mode = #tpu.pipeline_mode<synchronous>, transform_indices = @transform_1, window_bounds = array<i64: 128, 32>}, {pipeline_mode = #tpu.pipeline_mode<synchronous>, transform_indices = @transform_2, window_bounds = array<i64: 32, 48>}, {pipeline_mode = #tpu.pipeline_mode<synchronous>, transform_indices = @transform_3, window_bounds = array<i64: 32, 1>}, {pipeline_mode = #tpu.pipeline_mode<synchronous>, transform_indices = @transform_4, window_bounds = array<i64: 16, 32>}, {pipeline_mode = #tpu.pipeline_mode<synchronous>, transform_indices = @transform_5, window_bounds = array<i64: 16, 1>}, {pipeline_mode = #tpu.pipeline_mode<synchronous>, transform_indices = @transform_6, window_bounds = array<i64: 16, 1>}, {pipeline_mode = #tpu.pipeline_mode<synchronous>, transform_indices = @transform_7, window_bounds = array<i64: 1, 1>}, {transform_indices = @transform_8, window_bounds = array<i64: 1, 128>}]} {
    %c0 = arith.constant 0 : index
    %c0_0 = arith.constant 0 : index
    %0 = vector.load %arg1[%c0, %c0_0] : memref<128x32xf32, #tpu.memory_space<vmem>>, vector<128x32xf32>
    %c0_1 = arith.constant 0 : index
    %c0_2 = arith.constant 0 : index
    %1 = vector.load %arg2[%c0_1, %c0_2] : memref<128x32xf32, #tpu.memory_space<vmem>>, vector<128x32xf32>
    "tpu.trace_start"() <{level = 10 : i32, message = "mk,bk->mb"}> : () -> ()
    %cst = arith.constant dense<0.000000e+00> : vector<128x128xf32>
    %2 = tpu.matmul %1, %0, %cst {dimension_numbers = #tpu.dot_dimension_numbers<[1], [1], [0], [0], [0, 0, 1, 0], [], []>} : vector<128x32xf32>, vector<128x32xf32>, vector<128x128xf32> -> vector<128x128xf32>
    "tpu.trace_stop"() : () -> ()
    %3 = vector.extract_strided_slice %2 {offsets = [0, 0], sizes = [48, 128], strides = [1, 1]} : vector<128x128xf32> to vector<48x128xf32>
    %4 = vector.extract_strided_slice %2 {offsets = [48, 0], sizes = [48, 128], strides = [1, 1]} : vector<128x128xf32> to vector<48x128xf32>
    %5 = vector.extract_strided_slice %2 {offsets = [96, 0], sizes = [32, 128], strides = [1, 1]} : vector<128x128xf32> to vector<32x128xf32>
    %6 = arith.mulf %3, %4 : vector<48x128xf32>
    %c0_3 = arith.constant 0 : index
    %c0_4 = arith.constant 0 : index
    %7 = vector.load %arg3[%c0_3, %c0_4] : memref<32x48xf32, #tpu.memory_space<vmem>>, vector<32x48xf32>
    %cst_5 = arith.constant dense<0.000000e+00> : vector<32x128xf32>
    %8 = tpu.matmul %7, %6, %cst_5 {dimension_numbers = #tpu.dot_dimension_numbers<[1], [0], [0], [1], [0, 0, 1, 1], [], []>} : vector<32x48xf32>, vector<48x128xf32>, vector<32x128xf32> -> vector<32x128xf32>
    %9 = arith.addf %5, %8 : vector<32x128xf32>
    %c0_6 = arith.constant 0 : index
    %c0_7 = arith.constant 0 : index
    %10 = vector.load %arg4[%c0_6, %c0_7] : memref<32x1xf32, #tpu.memory_space<vmem>>, vector<32x1xf32>
    %11 = vector.broadcast %10 : vector<32x1xf32> to vector<32x128xf32>
    %12 = arith.addf %9, %11 : vector<32x128xf32>
    %cst_8 = arith.constant 0.000000e+00 : f32
    %13 = vector.broadcast %cst_8 : f32 to vector<32x128xf32>
    %14 = arith.maximumf %12, %13 : vector<32x128xf32>
    %c0_9 = arith.constant 0 : index
    %c0_10 = arith.constant 0 : index
    %15 = vector.load %arg5[%c0_9, %c0_10] : memref<16x32xf32, #tpu.memory_space<vmem>>, vector<16x32xf32>
    %cst_11 = arith.constant dense<0.000000e+00> : vector<16x128xf32>
    %16 = tpu.matmul %15, %14, %cst_11 {dimension_numbers = #tpu.dot_dimension_numbers<[1], [0], [0], [1], [0, 0, 1, 1], [], []>} : vector<16x32xf32>, vector<32x128xf32>, vector<16x128xf32> -> vector<16x128xf32>
    %c0_12 = arith.constant 0 : index
    %c0_13 = arith.constant 0 : index
    %17 = vector.load %arg6[%c0_12, %c0_13] : memref<16x1xf32, #tpu.memory_space<vmem>>, vector<16x1xf32>
    %18 = vector.broadcast %17 : vector<16x1xf32> to vector<16x128xf32>
    %19 = arith.addf %16, %18 : vector<16x128xf32>
    %cst_14 = arith.constant 0.000000e+00 : f32
    %20 = vector.broadcast %cst_14 : f32 to vector<16x128xf32>
    %21 = arith.maximumf %19, %20 : vector<16x128xf32>
    %c0_15 = arith.constant 0 : index
    %c0_16 = arith.constant 0 : index
    %22 = vector.load %arg7[%c0_15, %c0_16] : memref<16x1xf32, #tpu.memory_space<vmem>>, vector<16x1xf32>
    %23 = vector.broadcast %22 : vector<16x1xf32> to vector<16x128xf32>
    %24 = arith.mulf %21, %23 : vector<16x128xf32>
    %cst_17 = arith.constant dense<0.000000e+00> : vector<128xf32>
    %25 = vector.multi_reduction <add>, %24, %cst_17 [0] : vector<16x128xf32> to vector<128xf32>
    %26 = vector.shape_cast %25 : vector<128xf32> to vector<1x128xf32>
    %c0_18 = arith.constant 0 : index
    %c0_19 = arith.constant 0 : index
    %27 = vector.load %arg8[%c0_18, %c0_19] : memref<1x1xf32, #tpu.memory_space<vmem>>, vector<1x1xf32>
    %28 = vector.broadcast %27 : vector<1x1xf32> to vector<1x128xf32>
    %29 = arith.addf %26, %28 : vector<1x128xf32>
    %c0_20 = arith.constant 0 : index
    %c0_21 = arith.constant 0 : index
    %30 = vector.load %arg9[%c0_20, %c0_21] : memref<1x128xf32, #tpu.memory_space<vmem>>, vector<1x128xf32>
    tpu.vector_store %arg9[%c0_20, %c0_21], %29 {strides = array<i32>} : memref<1x128xf32, #tpu.memory_space<vmem>>, vector<1x128xf32>,
    return
  }
  func.func @transform_0(%arg0: i32) -> (i32, i32) {
    %c0_i32 = arith.constant 0 : i32
    %c0_i32_0 = arith.constant 0 : i32
    return %arg0, %c0_i32 : i32, i32
  }
  func.func @transform_1(%arg0: i32) -> (i32, i32) {
    %c0_i32 = arith.constant 0 : i32
    %c0_i32_0 = arith.constant 0 : i32
    %c0_i32_1 = arith.constant 0 : i32
    return %c0_i32, %c0_i32_0 : i32, i32
  }
  func.func @transform_2(%arg0: i32) -> (i32, i32) {
    %c0_i32 = arith.constant 0 : i32
    %c0_i32_0 = arith.constant 0 : i32
    %c0_i32_1 = arith.constant 0 : i32
    return %c0_i32, %c0_i32_0 : i32, i32
  }
  func.func @transform_3(%arg0: i32) -> (i32, i32) {
    %c0_i32 = arith.constant 0 : i32
    %c0_i32_0 = arith.constant 0 : i32
    %c0_i32_1 = arith.constant 0 : i32
    return %c0_i32, %c0_i32_0 : i32, i32
  }
  func.func @transform_4(%arg0: i32) -> (i32, i32) {
    %c0_i32 = arith.constant 0 : i32
    %c0_i32_0 = arith.constant 0 : i32
    %c0_i32_1 = arith.constant 0 : i32
    return %c0_i32, %c0_i32_0 : i32, i32
  }
  func.func @transform_5(%arg0: i32) -> (i32, i32) {
    %c0_i32 = arith.constant 0 : i32
    %c0_i32_0 = arith.constant 0 : i32
    %c0_i32_1 = arith.constant 0 : i32
    return %c0_i32, %c0_i32_0 : i32, i32
  }
  func.func @transform_6(%arg0: i32) -> (i32, i32) {
    %c0_i32 = arith.constant 0 : i32
    %c0_i32_0 = arith.constant 0 : i32
    %c0_i32_1 = arith.constant 0 : i32
    return %c0_i32, %c0_i32_0 : i32, i32
  }
  func.func @transform_7(%arg0: i32) -> (i32, i32) {
    %c0_i32 = arith.constant 0 : i32
    %c0_i32_0 = arith.constant 0 : i32
    %c0_i32_1 = arith.constant 0 : i32
    return %c0_i32, %c0_i32_0 : i32, i32
  }
  func.func @transform_8(%arg0: i32) -> (i32, i32) {
    %c0_i32 = arith.constant 0 : i32
    %c0_i32_0 = arith.constant 0 : i32
    return %c0_i32, %arg0 : i32, i32
  }
}

</mosaic_0001>

<llo_original>
// kernel: tpu_custom_call.1
$region0: #{tpu_custom_call.1}
  #allocation0 [shape = 'u32[]', space=smem, size = 0x4, offset = 0x4, fixed_abs, tag = 'smem constant byte address 0x4 - core index']
  #allocation1 [shape = 'u32[72,128]{1,0:T(1,128)}', space=vmem, size = 0x9000, scoped, tag = 'internal scratch']
  #allocation2 [shape = 'f32[1,1]{1,0:T(1,128)S(1)}', space=vmem, size = 0x200, scoped, tag = 'scoped memory for tpu_custom_call.1']
  %s0 = inlined_call_operand.vmem [shape: f32[128,32], index: 0, kind: input, shape index: {}]
  %s1 = inlined_call_operand.vmem [shape: f32[128,32], index: 1, kind: input, shape index: {}]
  %s2 = inlined_call_operand.vmem [shape: f32[32,48], index: 2, kind: input, shape index: {}]
  %s3 = inlined_call_operand.vmem [shape: f32[32,1], index: 3, kind: input, shape index: {}]
  %s4 = inlined_call_operand.vmem [shape: f32[16,32], index: 4, kind: input, shape index: {}]
  %s5 = inlined_call_operand.vmem [shape: f32[16,1], index: 5, kind: input, shape index: {}]
  %s6 = inlined_call_operand.vmem [shape: f32[16,1], index: 6, kind: input, shape index: {}]
  %s7 = inlined_call_operand.<no memory space> [shape: f32[1,1], index: 7, kind: input, shape index: {}]
  %s8 = inlined_call_operand.hbm [shape: f32[1,128], index: 8, kind: output, shape index: {}]
  %s9 = sld [smem:[#allocation0]]
  $region42: #{tpu_custom_call.1} parent=0
    _
  %s11 = ssub.s32 1, %s9
  %s12 = scalar_select 0, %s11, %s9
  %v13 = vstv %s7
  %14 = vst [vmem:[#allocation2] sm:$0x1] %v13
  $region1: #{tpu_custom_call.1} parent=0
    #allocation3 [shape = 'u8[512]{0}', space=vmem, size = 0x400, scoped, tag = 'output window, operand 0, single buffered']
    #allocation4 [shape = 's32[1]{0}', space=sflag, size = 0x4, scoped, tag = 'scoped memory for tpu_custom_call.1']
    %15 = vsyncpa [#allocation4], 0
    // Predicated region
    $region2: #{tpu_custom_call.1} parent=1 // pred_check
      _
    $region3: #{tpu_custom_call.1} parent=1 // pred_check_branch
      %17 = sbr.rel (0) target = $region5
    $region4: #{tpu_custom_call.1} parent=1 // pred_region
      _
    $region5: #{tpu_custom_call.1} parent=1 // pred_fallthru
      _
    // Predicated region
    $region6: #{tpu_custom_call.1} parent=1 // pred_check
      _
    $region7: #{tpu_custom_call.1} parent=1 // pred_check_branch
      %19 = sbr.rel (0) target = $region9
    $region8: #{tpu_custom_call.1} parent=1 // pred_region
      _
    $region9: #{tpu_custom_call.1} parent=1 // pred_fallthru
      _
    // Predicated region
    $region10: #{tpu_custom_call.1} parent=1 // pred_check
      _
    $region11: #{tpu_custom_call.1} parent=1 // pred_check_branch
      %21 = sbr.rel (0) target = $region13
    $region12: #{tpu_custom_call.1} parent=1 // pred_region
      _
    $region13: #{tpu_custom_call.1} parent=1 // pred_fallthru
      _
    // Predicated region
    $region14: #{tpu_custom_call.1} parent=1 // pred_check
      _
    $region15: #{tpu_custom_call.1} parent=1 // pred_check_branch
      %23 = sbr.rel (0) target = $region17
    $region16: #{tpu_custom_call.1} parent=1 // pred_region
      _
    $region17: #{tpu_custom_call.1} parent=1 // pred_fallthru
      _
    // Predicated region
    $region18: #{tpu_custom_call.1} parent=1 // pred_check
      _
    $region19: #{tpu_custom_call.1} parent=1 // pred_check_branch
      %25 = sbr.rel (0) target = $region21
    $region20: #{tpu_custom_call.1} parent=1 // pred_region
      _
    $region21: #{tpu_custom_call.1} parent=1 // pred_fallthru
      _
    // Predicated region
    $region22: #{tpu_custom_call.1} parent=1 // pred_check
      _
    $region23: #{tpu_custom_call.1} parent=1 // pred_check_branch
      %27 = sbr.rel (0) target = $region25
    $region24: #{tpu_custom_call.1} parent=1 // pred_region
      _
    $region25: #{tpu_custom_call.1} parent=1 // pred_fallthru
      _
    // Predicated region
    $region26: #{tpu_custom_call.1} parent=1 // pred_check
      _
    $region27: #{tpu_custom_call.1} parent=1 // pred_check_branch
      %29 = sbr.rel (0) target = $region29
    $region28: #{tpu_custom_call.1} parent=1 // pred_region
      _
    $region29: #{tpu_custom_call.1} parent=1 // pred_fallthru
      _
    // Predicated region
    $region30: #{tpu_custom_call.1} parent=1 // pred_check
      _
    $region31: #{tpu_custom_call.1} parent=1 // pred_check_branch
      %31 = sbr.rel (0) target = $region33
    $region32: #{tpu_custom_call.1} parent=1 // pred_region
      _
    $region33: #{tpu_custom_call.1} parent=1 // pred_fallthru
      _
    %v32 = vld [vmem:[%s0] sm:$0xff]
    %v33 = vld [vmem:[%s0 + $0x8] sm:$0xff]
    %v34 = vld [vmem:[%s0 + $0x10] sm:$0xff]
    %v35 = vld [vmem:[%s0 + $0x18] sm:$0xff]
    %v36 = vld [vmem:[%s0 + $0x20] sm:$0xff]
    %v37 = vld [vmem:[%s0 + $0x28] sm:$0xff]
    %v38 = vld [vmem:[%s0 + $0x30] sm:$0xff]
    %v39 = vld [vmem:[%s0 + $0x38] sm:$0xff]
    %v40 = vld [vmem:[%s0 + $0x40] sm:$0xff]
    %v41 = vld [vmem:[%s0 + $0x48] sm:$0xff]
    %v42 = vld [vmem:[%s0 + $0x50] sm:$0xff]
    %v43 = vld [vmem:[%s0 + $0x58] sm:$0xff]
    %v44 = vld [vmem:[%s0 + $0x60] sm:$0xff]
    %v45 = vld [vmem:[%s0 + $0x68] sm:$0xff]
    %v46 = vld [vmem:[%s0 + $0x70] sm:$0xff]
    %v47 = vld [vmem:[%s0 + $0x78] sm:$0xff]
    %v48 = vld [vmem:[%s1] sm:$0xff]
    %v49 = vld [vmem:[%s1 + $0x8] sm:$0xff]
    %v50 = vld [vmem:[%s1 + $0x10] sm:$0xff]
    %v51 = vld [vmem:[%s1 + $0x18] sm:$0xff]
    %v52 = vld [vmem:[%s1 + $0x20] sm:$0xff]
    %v53 = vld [vmem:[%s1 + $0x28] sm:$0xff]
    %v54 = vld [vmem:[%s1 + $0x30] sm:$0xff]
    %v55 = vld [vmem:[%s1 + $0x38] sm:$0xff]
    %v56 = vld [vmem:[%s1 + $0x40] sm:$0xff]
    %v57 = vld [vmem:[%s1 + $0x48] sm:$0xff]
    %v58 = vld [vmem:[%s1 + $0x50] sm:$0xff]
    %v59 = vld [vmem:[%s1 + $0x58] sm:$0xff]
    %v60 = vld [vmem:[%s1 + $0x60] sm:$0xff]
    %v61 = vld [vmem:[%s1 + $0x68] sm:$0xff]
    %v62 = vld [vmem:[%s1 + $0x70] sm:$0xff]
    %v63 = vld [vmem:[%s1 + $0x78] sm:$0xff]
    %vm64 = vcmask 261120
    %v66 = vsel %vm64, %v48, 0
    %v69 = vsel %vm64, %v49, 0
    %v72 = vsel %vm64, %v50, 0
    %v75 = vsel %vm64, %v51, 0
    %v78 = vsel %vm64, %v52, 0
    %v81 = vsel %vm64, %v53, 0
    %v84 = vsel %vm64, %v54, 0
    %v87 = vsel %vm64, %v55, 0
    %v90 = vsel %vm64, %v56, 0
    %v93 = vsel %vm64, %v57, 0
    %v96 = vsel %vm64, %v58, 0
    %v99 = vsel %vm64, %v59, 0
    %v102 = vsel %vm64, %v60, 0
    %v105 = vsel %vm64, %v61, 0
    %v108 = vsel %vm64, %v62, 0
    %v111 = vsel %vm64, %v63, 0
    %v114 = vsel %vm64, %v32, 0
    %v117 = vsel %vm64, %v33, 0
    %v120 = vsel %vm64, %v34, 0
    %v123 = vsel %vm64, %v35, 0
    %v126 = vsel %vm64, %v36, 0
    %v129 = vsel %vm64, %v37, 0
    %v132 = vsel %vm64, %v38, 0
    %v135 = vsel %vm64, %v39, 0
    %v138 = vsel %vm64, %v40, 0
    %v141 = vsel %vm64, %v41, 0
    %v144 = vsel %vm64, %v42, 0
    %v147 = vsel %vm64, %v43, 0
    %v150 = vsel %vm64, %v44, 0
    %v153 = vsel %vm64, %v45, 0
    %v156 = vsel %vm64, %v46, 0
    %v159 = vsel %vm64, %v47, 0
    %161 = vmatpush.xpose.msra.mxu0 %v159
    %162 = vmatpush.xpose.msra.mxu0 %v156
    %163 = vmatpush.xpose.msra.mxu0 %v153
    %164 = vmatpush.xpose.msra.mxu0 %v150
    %165 = vmatpush.xpose.msra.mxu0 %v147
    %166 = vmatpush.xpose.msra.mxu0 %v144
    %167 = vmatpush.xpose.msra.mxu0 %v141
    %168 = vmatpush.xpose.msra.mxu0 %v138
    %169 = vmatpush.xpose.msra.mxu0 %v135
    %170 = vmatpush.xpose.msra.mxu0 %v132
    %171 = vmatpush.xpose.msra.mxu0 %v129
    %172 = vmatpush.xpose.msra.mxu0 %v126
    %173 = vmatpush.xpose.msra.mxu0 %v123
    %174 = vmatpush.xpose.msra.mxu0 %v120
    %175 = vmatpush.xpose.msra.mxu0 %v117
    %176 = vmatpush.xpose.msra.mxu0 %v114
    %177 = vmatmul.f32.gmra.mxu0 %v66
    %v178 = vpop.f32.mrf.mxu0
    %v179 = vadd.f32 0.0, %v178
    %180 = vmatmul.f32.gmra.mxu0 %v69
    %v181 = vpop.f32.mrf.mxu0
    %v182 = vadd.f32 0.0, %v181
    %183 = vmatmul.f32.gmra.mxu0 %v72
    %v184 = vpop.f32.mrf.mxu0
    %v185 = vadd.f32 0.0, %v184
    %186 = vmatmul.f32.gmra.mxu0 %v75
    %v187 = vpop.f32.mrf.mxu0
    %v188 = vadd.f32 0.0, %v187
    %189 = vmatmul.f32.gmra.mxu0 %v78
    %v190 = vpop.f32.mrf.mxu0
    %v191 = vadd.f32 0.0, %v190
    %192 = vmatmul.f32.gmra.mxu0 %v81
    %v193 = vpop.f32.mrf.mxu0
    %v194 = vadd.f32 0.0, %v193
    %195 = vmatmul.f32.gmra.mxu0 %v84
    %v196 = vpop.f32.mrf.mxu0
    %v197 = vadd.f32 0.0, %v196
    %198 = vmatmul.f32.gmra.mxu0 %v87
    %v199 = vpop.f32.mrf.mxu0
    %v200 = vadd.f32 0.0, %v199
    %201 = vmatmul.f32.gmra.mxu0 %v90
    %v202 = vpop.f32.mrf.mxu0
    %v203 = vadd.f32 0.0, %v202
    %204 = vmatmul.f32.gmra.mxu0 %v93
    %v205 = vpop.f32.mrf.mxu0
    %v206 = vadd.f32 0.0, %v205
    %207 = vmatmul.f32.gmra.mxu0 %v96
    %v208 = vpop.f32.mrf.mxu0
    %v209 = vadd.f32 0.0, %v208
    %210 = vmatmul.f32.gmra.mxu0 %v99
    %v211 = vpop.f32.mrf.mxu0
    %v212 = vadd.f32 0.0, %v211
    %213 = vmatmul.f32.gmra.mxu0 %v102
    %v214 = vpop.f32.mrf.mxu0
    %v215 = vadd.f32 0.0, %v214
    %216 = vmatmul.f32.gmra.mxu0 %v105
    %v217 = vpop.f32.mrf.mxu0
    %v218 = vadd.f32 0.0, %v217
    %219 = vmatmul.f32.gmra.mxu0 %v108
    %v220 = vpop.f32.mrf.mxu0
    %v221 = vadd.f32 0.0, %v220
    %222 = vmatmul.f32.gmra.mxu0 %v111
    %v223 = vpop.f32.mrf.mxu0
    %v224 = vadd.f32 0.0, %v223
    %225 = vdwg.mxu0
    %v226 = vmul.f32 %v179, %v197
    %v227 = vmul.f32 %v182, %v200
    %v228 = vmul.f32 %v185, %v203
    %v229 = vmul.f32 %v188, %v206
    %v230 = vmul.f32 %v191, %v209
    %v231 = vmul.f32 %v194, %v212
    %v232 = vld [vmem:[%s2] sm:$0xff]
    %v233 = vld [vmem:[%s2 + $0x8] sm:$0xff]
    %v234 = vld [vmem:[%s2 + $0x10] sm:$0xff]
    %v235 = vld [vmem:[%s2 + $0x18] sm:$0xff]
    %vm236 = vcmask 392192
    %v238 = vsel %vm236, %v232, 0
    %v241 = vsel %vm236, %v233, 0
    %v244 = vsel %vm236, %v234, 0
    %v247 = vsel %vm236, %v235, 0
    %249 = vmatpush.msra.mxu0 0.0
    %250 = vmatpush.msra.mxu0 0.0
    %251 = vmatpush.msra.mxu0 0.0
    %252 = vmatpush.msra.mxu0 0.0
    %253 = vmatpush.msra.mxu0 0.0
    %254 = vmatpush.msra.mxu0 0.0
    %255 = vmatpush.msra.mxu0 0.0
    %256 = vmatpush.msra.mxu0 0.0
    %257 = vmatpush.msra.mxu0 0.0
    %258 = vmatpush.msra.mxu0 0.0
    %259 = vmatpush.msra.mxu0 %v231
    %260 = vmatpush.msra.mxu0 %v230
    %261 = vmatpush.msra.mxu0 %v229
    %262 = vmatpush.msra.mxu0 %v228
    %263 = vmatpush.msra.mxu0 %v227
    %264 = vmatpush.msra.mxu0 %v226
    %265 = vmatmul.f32.gmra.mxu0 %v238
    %v266 = vpop.f32.mrf.mxu0
    %v267 = vadd.f32 0.0, %v266
    %268 = vmatmul.f32.gmra.mxu0 %v241
    %v269 = vpop.f32.mrf.mxu0
    %v270 = vadd.f32 0.0, %v269
    %271 = vmatmul.f32.gmra.mxu0 %v244
    %v272 = vpop.f32.mrf.mxu0
    %v273 = vadd.f32 0.0, %v272
    %274 = vmatmul.f32.gmra.mxu0 %v247
    %v275 = vpop.f32.mrf.mxu0
    %v276 = vadd.f32 0.0, %v275
    %277 = vdwg.mxu0
    %v278 = vadd.f32 %v215, %v267
    %v279 = vadd.f32 %v218, %v270
    %v280 = vadd.f32 %v221, %v273
    %v281 = vadd.f32 %v224, %v276
    %v282 = vld [vmem:[%s3] sm:$0xff]
    %v283 = vld [vmem:[%s3 + $0x8] sm:$0xff]
    %v284 = vld [vmem:[%s3 + $0x10] sm:$0xff]
    %v285 = vld [vmem:[%s3 + $0x18] sm:$0xff]
    %287 = vset.pattern.permute.xlu0 0
    %288 = vperm.xlu0 %287, %v282
    %v289 = vpop.permute.xlu0 %288
    %292 = vset.pattern.permute.xlu0 0
    %293 = vperm.xlu0 %292, %v283
    %v294 = vpop.permute.xlu0 %293
    %297 = vset.pattern.permute.xlu0 0
    %298 = vperm.xlu0 %297, %v284
    %v299 = vpop.permute.xlu0 %298
    %302 = vset.pattern.permute.xlu0 0
    %303 = vperm.xlu0 %302, %v285
    %v304 = vpop.permute.xlu0 %303
    %v306 = vadd.f32 %v278, %v289
    %v307 = vadd.f32 %v279, %v294
    %v308 = vadd.f32 %v280, %v299
    %v309 = vadd.f32 %v281, %v304
    %v310 = vmax.f32 %v306, 0.0
    %v311 = vmax.f32 %v307, 0.0
    %v312 = vmax.f32 %v308, 0.0
    %v313 = vmax.f32 %v309, 0.0
    %v314 = vld [vmem:[%s4] sm:$0xff]
    %v315 = vld [vmem:[%s4 + $0x8] sm:$0xff]
    %v316 = vld [vmem:[%s5] sm:$0xff]
    %v317 = vld [vmem:[%s5 + $0x8] sm:$0xff]
    %319 = vset.pattern.permute.xlu0 0
    %320 = vperm.xlu0 %319, %v316
    %v321 = vpop.permute.xlu0 %320
    %324 = vset.pattern.permute.xlu0 0
    %325 = vperm.xlu0 %324, %v317
    %v326 = vpop.permute.xlu0 %325
    %v329 = vsel %vm64, %v314, 0
    %v332 = vsel %vm64, %v315, 0
    %334 = vmatpush.msra.mxu0 0.0
    %335 = vmatpush.msra.mxu0 0.0
    %336 = vmatpush.msra.mxu0 0.0
    %337 = vmatpush.msra.mxu0 0.0
    %338 = vmatpush.msra.mxu0 0.0
    %339 = vmatpush.msra.mxu0 0.0
    %340 = vmatpush.msra.mxu0 0.0
    %341 = vmatpush.msra.mxu0 0.0
    %342 = vmatpush.msra.mxu0 0.0
    %343 = vmatpush.msra.mxu0 0.0
    %344 = vmatpush.msra.mxu0 0.0
    %345 = vmatpush.msra.mxu0 0.0
    %346 = vmatpush.msra.mxu0 %v313
    %347 = vmatpush.msra.mxu0 %v312
    %348 = vmatpush.msra.mxu0 %v311
    %349 = vmatpush.msra.mxu0 %v310
    %350 = vmatmul.f32.gmra.mxu0 %v329
    %v351 = vpop.f32.mrf.mxu0
    %v352 = vadd.f32 %v321, %v351
    %353 = vmatmul.f32.gmra.mxu0 %v332
    %v354 = vpop.f32.mrf.mxu0
    %v355 = vadd.f32 %v326, %v354
    %356 = vdwg.mxu0
    %v357 = vmax.f32 %v352, 0.0
    %v358 = vmax.f32 %v355, 0.0
    %v359 = vld [vmem:[%s6] sm:$0xff]
    %v360 = vld [vmem:[%s6 + $0x8] sm:$0xff]
    %362 = vset.pattern.permute.xlu0 0
    %363 = vperm.xlu0 %362, %v359
    %v364 = vpop.permute.xlu0 %363
    %367 = vset.pattern.permute.xlu0 0
    %368 = vperm.xlu0 %367, %v360
    %v369 = vpop.permute.xlu0 %368
    %v371 = vmul.f32 %v357, %v364
    %v372 = vmul.f32 %v358, %v369
    %v373 = vadd.f32 %v371, %v372
    %v374 = vrot.slane %v373, 4
    %v375 = vadd.f32 %v373, %v374
    %v376 = vrot.slane %v375, 2
    %v377 = vadd.f32 %v375, %v376
    %v378 = vrot.slane %v377, 1
    %v379 = vadd.f32 %v377, %v378
    %v380 = vld [vmem:[#allocation2] sm:$0x1]
    %382 = vset.pattern.permute.xlu0 0
    %383 = vperm.xlu0 %382, %v380
    %v384 = vpop.permute.xlu0 %383
    %v386 = vperm.slane %v384, 0
    %v387 = vadd.f32 %v379, %v386
    %388 = vst [vmem:[#allocation3] sm:$0x1] %v387
    // Predicated region
    $region34: #{tpu_custom_call.1} parent=1 // pred_check
      _
    $region35: #{tpu_custom_call.1} parent=1 // pred_check_branch
      %390 = sbr.rel (0) target = $region37
    $region36: #{tpu_custom_call.1} parent=1 // pred_region
      %392 = vsyncadd [#allocation4], 0
      %s394 = sshll.u32 [#allocation3], 4
      %s395 = int_to_ptr.vmem [resolvable:$true] %s394
      %s396 = sshll.u32 %s8, 4
      %s397 = int_to_ptr.hbm [resolvable:$true] %s396
      %399 = dma.vmem_to_hbm [thread:$0]  %s395, 16, %s397, [#allocation4]
    $region37: #{tpu_custom_call.1} parent=1 // pred_fallthru
      _
    // Predicated region
    $region38: #{tpu_custom_call.1} parent=1 // pred_check
      _
    $region39: #{tpu_custom_call.1} parent=1 // pred_check_branch
      %401 = sbr.rel (0) target = $region41
    $region40: #{tpu_custom_call.1} parent=1 // pred_region
      %403 = dma.done [#allocation4], 16
    $region41: #{tpu_custom_call.1} parent=1 // pred_fallthru
      _
    %404 = vsyncpa [#allocation4], 1

</llo_original>
